<compile_context>
chip_gen: v5e
topology: v5e:2x2
jax: 0.10.0
libtpu: 0.0.40
codegen_flags: <defaults>
</compile_context>

<pallas_src>
import functools

import jax
import jax.numpy as jnp
from jax.experimental import pallas as pl
from jax.experimental.pallas import tpu as pltpu


def _round_up(x, m):
    return (x + m - 1) // m * m


def _mlp_kernel(x_ref, w_ref, b_ref, o_ref, h_ref, *, k_pad: int):
    """One (batch_tile, layer) grid step.

    x_ref: (B_blk, D_pad) f32    -- padded input, consumed only at layer 0
    w_ref: (1, K_pad, D_pad) bf16 -- this layer's weight, stored (in, out)
    b_ref: (1, 1, D_pad) f32
    o_ref: (B_blk, D_pad) f32    -- written only at the last layer
    h_ref: (B_blk, D_pad) f32    -- VMEM scratch: running activation across layers
    """
    l = pl.program_id(1)
    n_layers = pl.num_programs(1)

    @pl.when(l == 0)
    def _():
        h_ref[...] = x_ref[...]  # fresh activation for this batch tile

    # Only the first k_pad columns of h can be non-zero (zero weight/bias
    # padding + ReLU(0)=0), so contracting over k_pad columns is exact.
    lhs = h_ref[:, :k_pad].astype(jnp.bfloat16)
    y = jnp.dot(lhs, w_ref[0], preferred_element_type=jnp.float32) + b_ref[0]

    @pl.when(l < n_layers - 1)
    def _():
        h_ref[...] = jnp.maximum(y, 0.0)      # ReLU on hidden layers

    @pl.when(l == n_layers - 1)
    def _():
        o_ref[...] = y.astype(o_ref.dtype)    # no activation on the output layer


def mlp_forward_pallas(x_pad, w_all, b_all, *, b_blk):
    """Entire MLP as a single fused Pallas TPU kernel (grid over batch x layers)."""
    B_pad, D_pad = x_pad.shape
    L, K_pad, _ = w_all.shape
    m_tiles = B_pad // b_blk

    # Per-block VMEM footprint (inputs/outputs double-buffered) + headroom,
    # clamped below v7x's 64 MiB physical VMEM.
    block_bytes = (
        2 * b_blk * D_pad * 4      # x blocks
        + 2 * K_pad * D_pad * 2    # weight blocks (bf16)
        + 2 * D_pad * 4            # bias blocks
        + 2 * b_blk * D_pad * 4    # output blocks
        + b_blk * D_pad * 4        # activation scratch
    )
    vmem_limit = int(min(max(4 * block_bytes, 4 << 20), 48 << 20))

    kernel = functools.partial(_mlp_kernel, k_pad=K_pad)
    return pl.pallas_call(
        kernel,
        out_shape=jax.ShapeDtypeStruct((B_pad, D_pad), jnp.float32),
        grid=(m_tiles, L),
        in_specs=[
            pl.BlockSpec((b_blk, D_pad), lambda m, l: (m, 0)),
            pl.BlockSpec((1, K_pad, D_pad), lambda m, l: (l, 0, 0)),
            pl.BlockSpec((1, 1, D_pad), lambda m, l: (l, 0, 0)),
        ],
        out_specs=pl.BlockSpec((b_blk, D_pad), lambda m, l: (m, 0)),
        scratch_shapes=[pltpu.VMEM((b_blk, D_pad), jnp.float32)],
        compiler_params=pltpu.CompilerParams(
            dimension_semantics=("parallel", "arbitrary"),
            vmem_limit_bytes=vmem_limit,
        ),
    )(x_pad, w_all, b_all)


# ----------------------------- parameter setup -----------------------------

def xavier_uniform(key, fan_in, fan_out, dtype=jnp.float32):
    # Matches torch.nn.init.xavier_uniform_ (gain=1.0).
    a = jnp.sqrt(6.0 / (fan_in + fan_out))
    # Stored as (fan_in, fan_out) since the kernel computes x @ W.
    return jax.random.uniform(key, (fan_in, fan_out), dtype=dtype, minval=-a, maxval=a)


def init_net_params(key, n_in, n_l, n_n, n_out):
    """Per-layer (W (in,out), b (out,)) — mirrors net.__init__ (xavier W, zero b)."""
    dims = [(n_in, n_n)] + [(n_n, n_n)] * n_l + [(n_n, n_out)]
    params = []
    for din, dout in dims:
        key, sub = jax.random.split(key)
        params.append((xavier_uniform(sub, din, dout), jnp.zeros((dout,), jnp.float32)))
    return params


def pack_params(params, k_pad, d_pad):
    """Zero-pad every layer to (k_pad, d_pad), stack, cast weights to bf16 (once)."""
    L = len(params)
    w_all = jnp.zeros((L, k_pad, d_pad), jnp.float32)
    b_all = jnp.zeros((L, 1, d_pad), jnp.float32)
    for l, (w, b) in enumerate(params):
        din, dout = w.shape
        w_all = w_all.at[l, :din, :dout].set(w)
        b_all = b_all.at[l, 0, :dout].set(b)
    return w_all.astype(jnp.bfloat16), b_all  # bias stays f32 (added on VPU)


@functools.partial(jax.jit, static_argnames=("n_out",))
def net_forward(x, w_all, b_all, n_out):
    """Pad x to a lane-dense tile, run the fused kernel, slice the real output."""
    B, n_in = x.shape
    d_pad = w_all.shape[-1]
    b_blk = min(_round_up(B, 8), 256)     # 256-row M tiles at large batch
    b_pad = _round_up(B, b_blk)
    # TODO(synk): at large batch, keep x pre-padded (or mask the ragged tail
    # inside the kernel) so this pad isn't a separate per-call HBM pass.
    x_p = jnp.zeros((b_pad, d_pad), jnp.float32).at[:B, :n_in].set(x)
    out_p = mlp_forward_pallas(x_p, w_all, b_all, b_blk=b_blk)
    return out_p[:B, :n_out]


# ------------------------------- references --------------------------------

def net_forward_ref_bf16(params, x):
    """Matches kernel numerics: bf16 dot operands, f32 accumulate, f32 bias/ReLU."""
    n_layers = len(params)
    for idx, (w, b) in enumerate(params):
        x = jnp.dot(x.astype(jnp.bfloat16), w.astype(jnp.bfloat16),
                    preferred_element_type=jnp.float32) + b
        if idx != n_layers - 1:
            x = jnp.maximum(x, 0.0)
    return x


def net_forward_ref_f32(params, x):
    """Exact f32 reference of the module semantics."""
    n_layers = len(params)
    for idx, (w, b) in enumerate(params):
        x = jnp.dot(x, w, preferred_element_type=jnp.float32,
                    precision=jax.lax.Precision.HIGHEST) + b
        if idx != n_layers - 1:
            x = jnp.maximum(x, 0.0)
    return x


if __name__ == "__main__":
    # Shapes consistent with the module: n_in=16, n_l=2, n_n=32, n_out=8, batch=8.
    n_in, n_l, n_n, n_out = 16, 2, 32, 8
    batch = 8

    key = jax.random.PRNGKey(0)
    key, pkey, xkey = jax.random.split(key, 3)

    params = init_net_params(pkey, n_in, n_l, n_n, n_out)

    # Lane (output) dim padded to 128; contraction dim only to bf16 sublane (16).
    d_pad = _round_up(max(n_in, n_n, n_out), 128)
    k_pad = _round_up(max(n_in, n_n), 16)
    w_all, b_all = pack_params(params, k_pad, d_pad)

    x = jax.random.normal(xkey, (batch, n_in), dtype=jnp.float32)

    out = net_forward(x, w_all, b_all, n_out)
    out = jax.block_until_ready(out)
    assert out.shape == (batch, n_out), out.shape

    ref_bf16 = net_forward_ref_bf16(params, x)
    ref_f32 = net_forward_ref_f32(params, x)
    assert jnp.allclose(out, ref_bf16, atol=1e-4, rtol=1e-4), (
        "mismatch vs bf16-matched reference: "
        f"{float(jnp.max(jnp.abs(out - ref_bf16)))}")
    # Sanity check vs exact f32 math (difference = bf16 operand rounding only).
    assert jnp.allclose(out, ref_f32, atol=5e-2, rtol=5e-2), (
        "mismatch vs f32 reference: "
        f"{float(jnp.max(jnp.abs(out - ref_f32)))}")

    print("KERNEL_OK")
</pallas_src>

<mosaic_0001>
module attributes {stable_mosaic.version = 11 : i64} {
  func.func @_mlp_kernel(%arg0: i32, %arg1: i32, %arg2: memref<8x128xf32, #tpu.memory_space<vmem>>, %arg3: memref<1x32x128xbf16, #tpu.memory_space<vmem>>, %arg4: memref<1x1x128xf32, #tpu.memory_space<vmem>>, %arg5: memref<8x128xf32, #tpu.memory_space<vmem>>, %arg6: memref<8x128xf32, #tpu.memory_space<vmem>>) attributes {dimension_semantics = [#tpu.dimension_semantics<parallel>, #tpu.dimension_semantics<arbitrary>], iteration_bounds = array<i64: 1, 4>, scalar_prefetch = 0 : i64, scratch_operands = 1 : i64, tpu.core_type = #tpu.core_type<tc>, window_params = [{transform_indices = @transform_0, window_bounds = array<i64: 8, 128>}, {transform_indices = @transform_1, window_bounds = array<i64: 1, 32, 128>}, {transform_indices = @transform_2, window_bounds = array<i64: 1, 1, 128>}, {transform_indices = @transform_3, window_bounds = array<i64: 8, 128>}]} {
    %c0_i32 = arith.constant 0 : i32
    %0 = arith.cmpi eq, %arg1, %c0_i32 : i32
    %1 = arith.extui %0 : i1 to i32
    %c0_i32_0 = arith.constant 0 : i32
    %2 = arith.cmpi ne, %1, %c0_i32_0 : i32
    scf.if %2 {
      %c0_11 = arith.constant 0 : index
      %c0_12 = arith.constant 0 : index
      %18 = vector.load %arg2[%c0_11, %c0_12] : memref<8x128xf32, #tpu.memory_space<vmem>>, vector<8x128xf32>
      %c0_13 = arith.constant 0 : index
      %c0_14 = arith.constant 0 : index
      %19 = vector.load %arg6[%c0_13, %c0_14] : memref<8x128xf32, #tpu.memory_space<vmem>>, vector<8x128xf32>
      tpu.vector_store %arg6[%c0_13, %c0_14], %18 {strides = array<i32>} : memref<8x128xf32, #tpu.memory_space<vmem>>, vector<8x128xf32>,
    } else {
    }
    %c0 = arith.constant 0 : index
    %c0_1 = arith.constant 0 : index
    %3 = vector.load %arg6[%c0, %c0_1] : memref<8x128xf32, #tpu.memory_space<vmem>>, vector<8x32xf32>
    %4 = arith.truncf %3 : vector<8x32xf32> to vector<8x32xbf16>
    %c0_2 = arith.constant 0 : index
    %c0_3 = arith.constant 0 : index
    %c0_4 = arith.constant 0 : index
    %5 = vector.load %arg3[%c0_2, %c0_3, %c0_4] : memref<1x32x128xbf16, #tpu.memory_space<vmem>>, vector<1x32x128xbf16>
    %6 = vector.shape_cast %5 : vector<1x32x128xbf16> to vector<32x128xbf16>
    %cst = arith.constant dense<0.000000e+00> : vector<8x128xf32>
    %7 = tpu.matmul %4, %6, %cst {dimension_numbers = #tpu.dot_dimension_numbers<[1], [0], [0], [1], [0, 0, 1, 1], [], []>} : vector<8x32xbf16>, vector<32x128xbf16>, vector<8x128xf32> -> vector<8x128xf32>
    %c0_5 = arith.constant 0 : index
    %c0_6 = arith.constant 0 : index
    %c0_7 = arith.constant 0 : index
    %8 = vector.load %arg4[%c0_5, %c0_6, %c0_7] : memref<1x1x128xf32, #tpu.memory_space<vmem>>, vector<1x1x128xf32>
    %9 = vector.shape_cast %8 : vector<1x1x128xf32> to vector<1x128xf32>
    %10 = vector.broadcast %9 : vector<1x128xf32> to vector<8x128xf32>
    %11 = arith.addf %7, %10 : vector<8x128xf32>
    %c3_i32 = arith.constant 3 : i32
    %12 = arith.cmpi slt, %arg1, %c3_i32 : i32
    %13 = arith.extui %12 : i1 to i32
    %c0_i32_8 = arith.constant 0 : i32
    %14 = arith.cmpi ne, %13, %c0_i32_8 : i32
    scf.if %14 {
      %cst_11 = arith.constant 0.000000e+00 : f32
      %18 = vector.broadcast %cst_11 : f32 to vector<8x128xf32>
      %19 = arith.maximumf %11, %18 : vector<8x128xf32>
      %c0_12 = arith.constant 0 : index
      %c0_13 = arith.constant 0 : index
      %20 = vector.load %arg6[%c0_12, %c0_13] : memref<8x128xf32, #tpu.memory_space<vmem>>, vector<8x128xf32>
      tpu.vector_store %arg6[%c0_12, %c0_13], %19 {strides = array<i32>} : memref<8x128xf32, #tpu.memory_space<vmem>>, vector<8x128xf32>,
    } else {
    }
    %c3_i32_9 = arith.constant 3 : i32
    %15 = arith.cmpi eq, %arg1, %c3_i32_9 : i32
    %16 = arith.extui %15 : i1 to i32
    %c0_i32_10 = arith.constant 0 : i32
    %17 = arith.cmpi ne, %16, %c0_i32_10 : i32
    scf.if %17 {
      %c0_11 = arith.constant 0 : index
      %c0_12 = arith.constant 0 : index
      %18 = vector.load %arg5[%c0_11, %c0_12] : memref<8x128xf32, #tpu.memory_space<vmem>>, vector<8x128xf32>
      tpu.vector_store %arg5[%c0_11, %c0_12], %11 {strides = array<i32>} : memref<8x128xf32, #tpu.memory_space<vmem>>, vector<8x128xf32>,
    } else {
    }
    return
  }
  func.func @transform_0(%arg0: i32, %arg1: i32) -> (i32, i32) {
    %c0_i32 = arith.constant 0 : i32
    %c0_i32_0 = arith.constant 0 : i32
    return %arg0, %c0_i32 : i32, i32
  }
  func.func @transform_1(%arg0: i32, %arg1: i32) -> (i32, i32, i32) {
    %c0_i32 = arith.constant 0 : i32
    %c0_i32_0 = arith.constant 0 : i32
    %c0_i32_1 = arith.constant 0 : i32
    return %arg1, %c0_i32, %c0_i32_0 : i32, i32, i32
  }
  func.func @transform_2(%arg0: i32, %arg1: i32) -> (i32, i32, i32) {
    %c0_i32 = arith.constant 0 : i32
    %c0_i32_0 = arith.constant 0 : i32
    %c0_i32_1 = arith.constant 0 : i32
    return %arg1, %c0_i32, %c0_i32_0 : i32, i32, i32
  }
  func.func @transform_3(%arg0: i32, %arg1: i32) -> (i32, i32) {
    %c0_i32 = arith.constant 0 : i32
    %c0_i32_0 = arith.constant 0 : i32
    return %arg0, %c0_i32 : i32, i32
  }
}

</mosaic_0001>

<llo_original>
// kernel: net_forward.1
$region0: #{net_forward.1}
  #allocation0 [shape = 'u32[]', space=smem, size = 0x4, offset = 0x4, fixed_abs, tag = 'smem constant byte address 0x4 - core index']
  #allocation1 [shape = 'u32[72,128]{1,0:T(1,128)}', space=vmem, size = 0x9000, scoped, tag = 'internal scratch']
  #allocation2 [shape = 'f32[8,128]{1,0:T(8,128)}', space=vmem, size = 0x1000, scoped, tag = 'scratch operand']
  %s0 = inlined_call_operand.vmem [shape: f32[8,128], index: 0, kind: input, shape index: {}]
  %s1 = inlined_call_operand.hbm [shape: bf16[4,32,128], index: 1, kind: input, shape index: {}]
  %s2 = inlined_call_operand.vmem [shape: f32[4,1,128], index: 2, kind: input, shape index: {}]
  %s3 = inlined_call_operand.hbm [shape: f32[8,128], index: 3, kind: output, shape index: {}]
  %s4 = sld [smem:[#allocation0]]
  $region61: #{net_forward.1} parent=0
    _
  %s6 = ssub.s32 1, %s4
  %s7 = scalar_select 0, %s6, %s4
  $region1: #{net_forward.1} parent=0
    #allocation3 [shape = 'u8[16384]{0}', space=vmem, size = 0x4000, scoped, tag = 'input window, operand 1']
    #allocation4 [shape = 's32[2]{0}', space=sflag, size = 0x8, scoped, tag = 'scoped memory for net_forward.1']
    #allocation5 [shape = 's32[2]{0}', space=sflag, size = 0x8, scoped, tag = 'scoped memory for net_forward.1']
    #allocation6 [shape = 'u8[4096]{0}', space=vmem, size = 0x1000, scoped, tag = 'output window, operand 0, single buffered']
    %8 = vsyncpa [#allocation4], 0
    %s9 = scalar_lea.sflag [#allocation4], 1
    %10 = vsyncpa %s9, 0
    %11 = vsyncpa [#allocation5], 0
    loop: start=0, step=1, limit=6
    $region2: #{net_forward.1} parent=1 // loop_pre_header
      _
    $region3: #{net_forward.1} parent=1 // loop_header
      %s13 = sphi 0, %s17
      %p14 = scmp.ge.s32.totalorder %s13, 6
      %s20 = sphi 0, %s32
      %s21 = sphi 0, %s28
      %s22 = sphi 0, %s20
      %s23 = sphi 0, %s21
      %s24 = sphi 0, %s22
      %s25 = sphi 0, %s23
      %s35 = sphi 0, %s37
      %s38 = sphi 0, %s35
      %s39 = sphi 0, %s38
      %s55 = sphi 0, %s39
      %s61 = sphi 0, %s63
      %s64 = sphi 0, %s61
      %s65 = sphi 0, %s64
      %s81 = sphi 0, %s65
      %s87 = sphi 0, %s89
      %s90 = sphi 0, %s87
      %s91 = sphi 0, %s90
      %s107 = sphi 0, %s91
      %s113 = sphi 0, %s115
      %s116 = sphi 0, %s113
      %s117 = sphi 0, %s116
      %s133 = sphi 0, %s117
    $region4: #{net_forward.1} parent=1 // loop_header_branch
      %16 = sbr.rel (%p14) target = $region8
    $region5: #{net_forward.1} parent=1 // loop_body
      %s18 = ssub.s32 %s13, 1
      %s19 = ssub.s32 %s13, 2
      %s26 = sadd.s32 1, %s21
      %p27 = scmp.ge.s32.totalorder %s26, 4
      %s28 = scalar_select %p27, 0, %s26
      %s29 = sadd.s32 1, %s20
      %s30 = scalar_select %p27, %s29, %s20
      %p31 = scmp.ge.s32.totalorder %s30, 1
      %s32 = scalar_select %p31, 0, %s30
      %s33 = ssub.s32 %s20, %s32
      %p34 = scmp.eq.s32.totalorder %s33, 0
      %s36 = sadd.s32 %s35, 1
      %s37 = scalar_select %p34, %s35, %s36
      %p40 = pneg %p34
      %p41 = scmp.eq.s32.totalorder %s13, 3
      %p42 = por %p40, %p41
      %p43 = scmp.ne.s32.totalorder %s35, %s38
      %p44 = scmp.eq.s32.totalorder %s13, 0
      %p45 = por %p43, %p44
      %p46 = scmp.ne.s32.totalorder %s35, %s38
      %p47 = scmp.eq.s32.totalorder %s18, 3
      %p48 = por %p46, %p47
      %p49 = scmp.ne.s32.totalorder %s38, %s39
      %p50 = scmp.eq.s32.totalorder %s18, 0
      %p51 = por %p49, %p50
      %p52 = scmp.ne.s32.totalorder %s38, %s39
      %p53 = scmp.eq.s32.totalorder %s19, 3
      %p54 = por %p52, %p53
      %p56 = scmp.ne.s32.totalorder %s39, %s55
      %p57 = scmp.eq.s32.totalorder %s19, 0
      %p58 = por %p56, %p57
      %s59 = ssub.s32 %s21, %s28
      %p60 = scmp.eq.s32.totalorder %s59, 0
      %s62 = sadd.s32 %s61, 1
      %s63 = scalar_select %p60, %s61, %s62
      %p66 = pneg %p60
      %p67 = scmp.eq.s32.totalorder %s13, 3
      %p68 = por %p66, %p67
      %p69 = scmp.ne.s32.totalorder %s61, %s64
      %p70 = scmp.eq.s32.totalorder %s13, 0
      %p71 = por %p69, %p70
      %p72 = scmp.ne.s32.totalorder %s61, %s64
      %p73 = scmp.eq.s32.totalorder %s18, 3
      %p74 = por %p72, %p73
      %p75 = scmp.ne.s32.totalorder %s64, %s65
      %p76 = scmp.eq.s32.totalorder %s18, 0
      %p77 = por %p75, %p76
      %p78 = scmp.ne.s32.totalorder %s64, %s65
      %p79 = scmp.eq.s32.totalorder %s19, 3
      %p80 = por %p78, %p79
      %p82 = scmp.ne.s32.totalorder %s65, %s81
      %p83 = scmp.eq.s32.totalorder %s19, 0
      %p84 = por %p82, %p83
      %s85 = ssub.s32 %s21, %s28
      %p86 = scmp.eq.s32.totalorder %s85, 0
      %s88 = sadd.s32 %s87, 1
      %s89 = scalar_select %p86, %s87, %s88
      %p92 = pneg %p86
      %p93 = scmp.eq.s32.totalorder %s13, 3
      %p94 = por %p92, %p93
      %p95 = scmp.ne.s32.totalorder %s87, %s90
      %p96 = scmp.eq.s32.totalorder %s13, 0
      %p97 = por %p95, %p96
      %p98 = scmp.ne.s32.totalorder %s87, %s90
      %p99 = scmp.eq.s32.totalorder %s18, 3
      %p100 = por %p98, %p99
      %p101 = scmp.ne.s32.totalorder %s90, %s91
      %p102 = scmp.eq.s32.totalorder %s18, 0
      %p103 = por %p101, %p102
      %p104 = scmp.ne.s32.totalorder %s90, %s91
      %p105 = scmp.eq.s32.totalorder %s19, 3
      %p106 = por %p104, %p105
      %p108 = scmp.ne.s32.totalorder %s91, %s107
      %p109 = scmp.eq.s32.totalorder %s19, 0
      %p110 = por %p108, %p109
      %s111 = ssub.s32 %s20, %s32
      %p112 = scmp.eq.s32.totalorder %s111, 0
      %s114 = sadd.s32 %s113, 1
      %s115 = scalar_select %p112, %s113, %s114
      %p118 = pneg %p112
      %p119 = scmp.eq.s32.totalorder %s13, 3
      %p120 = por %p118, %p119
      %p121 = scmp.ne.s32.totalorder %s113, %s116
      %p122 = scmp.eq.s32.totalorder %s13, 0
      %p123 = por %p121, %p122
      %p124 = scmp.ne.s32.totalorder %s113, %s116
      %p125 = scmp.eq.s32.totalorder %s18, 3
      %p126 = por %p124, %p125
      %p127 = scmp.ne.s32.totalorder %s116, %s117
      %p128 = scmp.eq.s32.totalorder %s18, 0
      %p129 = por %p127, %p128
      %p130 = scmp.ne.s32.totalorder %s116, %s117
      %p131 = scmp.eq.s32.totalorder %s19, 3
      %p132 = por %p130, %p131
      %p134 = scmp.ne.s32.totalorder %s117, %s133
      %p135 = scmp.eq.s32.totalorder %s19, 0
      %p136 = por %p134, %p135
      %p137 = scmp.le.s32.totalorder 1, %s13
      %p138 = scmp.lt.s32.totalorder %s13, 5
      %p139 = pnand %p137, %p138
      %p140 = pneg %p139
      // Predicated region
      $region9: #{net_forward.1} parent=5 // pred_check
        _
      $region10: #{net_forward.1} parent=5 // pred_check_branch
        %142 = sbr.rel (%p139) target = $region12
      $region11: #{net_forward.1} parent=5 // pred_region
        %s143 = ssub.s32 %s13, 1
        // Predicated region
        $region13: #{net_forward.1} parent=11 // pred_check
          %p144 = pneg %p51
        $region14: #{net_forward.1} parent=11 // pred_check_branch
          %146 = sbr.rel (%p144) target = $region16
        $region15: #{net_forward.1} parent=11 // pred_region
          %p147 = scmp.lt.s32.totalorder %s22, 0
          %s148 = scalar_select %p147, %s22, 0
          %s149 = smul.addr %s148, 8
          %s150 = scalar_lea.vmem %s0, %s149
        $region16: #{net_forward.1} parent=11 // pred_fallthru
          _
      $region12: #{net_forward.1} parent=5 // pred_fallthru
        _
      %p151 = scmp.lt.s32.totalorder %s13, 4
      // Predicated region
      $region17: #{net_forward.1} parent=5 // pred_check
        %p152 = pneg %p151
      $region18: #{net_forward.1} parent=5 // pred_check_branch
        %154 = sbr.rel (%p152) target = $region20
      $region19: #{net_forward.1} parent=5 // pred_region
        // Predicated region
        $region21: #{net_forward.1} parent=19 // pred_check
          %p155 = pneg %p71
        $region22: #{net_forward.1} parent=19 // pred_check_branch
          %157 = sbr.rel (%p155) target = $region24
        $region23: #{net_forward.1} parent=19 // pred_region
          %s158 = sand.u32 %s61, 1
          %s159 = scalar_lea.sflag [#allocation4], %s158
          %s160 = sand.u32 %s61, 1
          %s161 = smul.addr %s160, 16
          %s162 = scalar_lea.vmem [#allocation3], %s161
          %164 = vsyncadd %s159, 0
          %s165 = smul.addr %s21, 4
          %s166 = smul.addr %s165, 4
          %s167 = scalar_lea.hbm %s1, %s166
          %s168 = sshll.u32 %s167, 4
          %s169 = int_to_ptr.hbm [resolvable:$true] %s168
          %s170 = sshll.u32 %s162, 4
          %s171 = int_to_ptr.vmem [resolvable:$true] %s170
          %176 = dma.hbm_to_vmem [thread:$0]  %s169, 256, %s171, %s159, 64, 64, 4
        $region24: #{net_forward.1} parent=19 // pred_fallthru
          _
        // Predicated region
        $region25: #{net_forward.1} parent=19 // pred_check
          %p177 = pneg %p97
        $region26: #{net_forward.1} parent=19 // pred_check_branch
          %179 = sbr.rel (%p177) target = $region28
        $region27: #{net_forward.1} parent=19 // pred_region
          %p180 = scmp.lt.s32.totalorder %s21, 3
          %s181 = scalar_select %p180, %s21, 3
          %s182 = scalar_lea.vmem %s2, %s181
        $region28: #{net_forward.1} parent=19 // pred_fallthru
          _
      $region20: #{net_forward.1} parent=5 // pred_fallthru
        _
      %p183 = scmp.le.s32.totalorder 1, %s13
      %p184 = scmp.lt.s32.totalorder %s13, 5
      %p185 = pnand %p183, %p184
      %p186 = pneg %p185
      // Predicated region
      $region29: #{net_forward.1} parent=5 // pred_check
        _
      $region30: #{net_forward.1} parent=5 // pred_check_branch
        %188 = sbr.rel (%p185) target = $region32
      $region31: #{net_forward.1} parent=5 // pred_region
        %s189 = ssub.s32 %s13, 1
        %s190 = sand.u32 %s64, 1
        %s191 = scalar_lea.sflag [#allocation4], %s190
        %s192 = sand.u32 %s64, 1
        %s193 = smul.addr %s192, 16
        %s194 = scalar_lea.vmem [#allocation3], %s193
        // Predicated region
        $region33: #{net_forward.1} parent=31 // pred_check
          %p195 = pneg %p77
        $region34: #{net_forward.1} parent=31 // pred_check_branch
          %197 = sbr.rel (%p195) target = $region36
        $region35: #{net_forward.1} parent=31 // pred_region
          %199 = dma.done %s191, 256
        $region36: #{net_forward.1} parent=31 // pred_fallthru
          _
        %p200 = scmp.lt.s32.totalorder %s22, 0
        %s201 = scalar_select %p200, %s22, 0
        %s202 = smul.addr %s201, 8
        %s203 = scalar_lea.vmem %s0, %s202
        %p204 = pneg %p51
        %p205 = pneg %p48
        %s206 = sand.u32 %s64, 1
        %s207 = scalar_lea.sflag [#allocation4], %s206
        %s208 = sand.u32 %s64, 1
        %s209 = smul.addr %s208, 16
        %s210 = scalar_lea.vmem [#allocation3], %s209
        %p211 = pneg %p77
        %p212 = pneg %p74
        %p213 = scmp.lt.s32.totalorder %s23, 3
        %s214 = scalar_select %p213, %s23, 3
        %s215 = scalar_lea.vmem %s2, %s214
        %p216 = pneg %p103
        %p217 = pneg %p100
        %p218 = pneg %p129
        %p219 = pneg %p126
        %p220 = scmp.lt.s32.totalorder %s22, 0
        %s221 = scalar_select %p220, %s22, 0
        %s222 = smul.addr %s221, 8
        %s223 = scalar_lea.vmem %s0, %s222
        %p224 = scmp.lt.s32.totalorder %s23, 3
        %s225 = scalar_select %p224, %s23, 3
        %s226 = scalar_lea.vmem %s2, %s225
        %p228 = scmp.eq.s32.totalorder %s23, 0
        // Predicated region
        $region37: #{net_forward.1} parent=31 // pred_check
          %p229 = pneg %p228
        $region38: #{net_forward.1} parent=31 // pred_check_branch
          %231 = sbr.rel (%p229) target = $region40
        $region39: #{net_forward.1} parent=31 // pred_region
          %v232 = vld [vmem:[%s223] sm:$0xff]
          %233 = vst [vmem:[#allocation2] sm:$0xff] %v232
        $region40: #{net_forward.1} parent=31 // pred_fallthru
          _
        %v234 = vld [vmem:[#allocation2] sm:$0xff]
        %v235 = vpack.c.bf16 %v234, %v234
        %v236 = vld [vmem:[%s194] sm:$0xf]
        %v237 = vld [vmem:[%s194 + $0x4] sm:$0xf]
        %v238 = vld [vmem:[%s194 + $0x8] sm:$0xf]
        %v239 = vld [vmem:[%s194 + $0xc] sm:$0xf]
        %v240 = vld [vmem:[%s226] sm:$0x1]
        %v242 = vperm.slane %v240, 0
        %v248 = vunpack.c.l.b16 %v236
        %v249 = vunpack.c.l.b16 %v237
        %v250 = vunpack.c.l.b16 %v238
        %v251 = vunpack.c.l.b16 %v239
        %v252 = vpack.c.b16 %v249, %v248
        %v253 = vpack.c.b16 %v251, %v250
        %vm256 = vcmask 261120
        %v258 = vsel %vm256, %v235, 0
        %260 = vmatpush.bf16.msra.mxu0 0
        %261 = vmatpush.bf16.msra.mxu0 0
        %262 = vmatpush.bf16.msra.mxu0 0
        %263 = vmatpush.bf16.msra.mxu0 0
        %264 = vmatpush.bf16.msra.mxu0 0
        %265 = vmatpush.bf16.msra.mxu0 0
        %266 = vmatpush.bf16.msra.mxu0 %v253
        %267 = vmatpush.bf16.msra.mxu0 %v252
        %268 = vmatmul.bf16.gmra.mxu0 %v258
        %v269 = vpop.f32.mrf.mxu0
        %v270 = vadd.f32 %v242, %v269
        %v271 = vpop.f32.mrf.mxu0
        %272 = vdwg.mxu0
        %p273 = scmp.lt.s32.totalorder %s23, 3
        // Predicated region
        $region41: #{net_forward.1} parent=31 // pred_check
          %p274 = pneg %p273
        $region42: #{net_forward.1} parent=31 // pred_check_branch
          %276 = sbr.rel (%p274) target = $region44
        $region43: #{net_forward.1} parent=31 // pred_region
          %v277 = vmax.f32 %v270, 0.0
          %278 = vst [vmem:[#allocation2] sm:$0xff] %v277
        $region44: #{net_forward.1} parent=31 // pred_fallthru
          _
        %p279 = scmp.eq.s32.totalorder %s23, 3
        // Predicated region
        $region45: #{net_forward.1} parent=31 // pred_check
          %p280 = pneg %p279
        $region46: #{net_forward.1} parent=31 // pred_check_branch
          %282 = sbr.rel (%p280) target = $region48
        $region47: #{net_forward.1} parent=31 // pred_region
          %283 = vst [vmem:[#allocation6] sm:$0xff] %v270
        $region48: #{net_forward.1} parent=31 // pred_fallthru
          _
        // Predicated region
        $region49: #{net_forward.1} parent=31 // pred_check
          %p284 = pneg %p126
        $region50: #{net_forward.1} parent=31 // pred_check_branch
          %286 = sbr.rel (%p284) target = $region52
        $region51: #{net_forward.1} parent=31 // pred_region
          %288 = vsyncadd [#allocation5], 0
          %s289 = smul.addr %s22, 8
          %s290 = scalar_lea.hbm %s3, %s289
          %s292 = sshll.u32 [#allocation6], 4
          %s293 = int_to_ptr.vmem [resolvable:$true] %s292
          %s294 = sshll.u32 %s290, 4
          %s295 = int_to_ptr.hbm [resolvable:$true] %s294
          %297 = dma.vmem_to_hbm [thread:$0]  %s293, 128, %s295, [#allocation5]
        $region52: #{net_forward.1} parent=31 // pred_fallthru
          _
        // Predicated region
        $region53: #{net_forward.1} parent=31 // pred_check
          %p298 = pneg %p126
        $region54: #{net_forward.1} parent=31 // pred_check_branch
          %300 = sbr.rel (%p298) target = $region56
        $region55: #{net_forward.1} parent=31 // pred_region
          %302 = dma.done [#allocation5], 128
        $region56: #{net_forward.1} parent=31 // pred_fallthru
          _
      $region32: #{net_forward.1} parent=5 // pred_fallthru
        _
      %p303 = scmp.le.s32.totalorder 2, %s13
      // Predicated region
      $region57: #{net_forward.1} parent=5 // pred_check
        %p304 = pneg %p303
      $region58: #{net_forward.1} parent=5 // pred_check_branch
        %306 = sbr.rel (%p304) target = $region60
      $region59: #{net_forward.1} parent=5 // pred_region
        %s307 = ssub.s32 %s13, 2
      $region60: #{net_forward.1} parent=5 // pred_fallthru
        _
    $region6: #{net_forward.1} parent=1 // loop_footer
      %s17 = sadd.s32 1, %s13
    $region7: #{net_forward.1} parent=1 // loop_footer_branch
      %12 = sbr.rel target = $region3
    $region8: #{net_forward.1} parent=1 // loop_exit
      _
    %308 = vsyncpa [#allocation4], 1
    %s309 = scalar_lea.sflag [#allocation4], 1
    %310 = vsyncpa %s309, 1
    %311 = vsyncpa [#allocation5], 1
    %s312 = scalar_lea.sflag [#allocation5], 1
    %313 = vsyncpa %s312, 1

</llo_original>
